<compile_context>
chip_gen: v6e
topology: v6e:2x2x1
jax: 0.10.0
libtpu: 0.0.40
codegen_flags: <defaults>
</compile_context>

<pallas_src>
import jax
import jax.numpy as jnp
from jax.experimental import pallas as pl
from jax.experimental.pallas import tpu as pltpu


def scse_kernel(x_ref, c_att_ref, ws_ref, bs_ref, o_ref):
    # x_ref block: (1, C, HW_T)  -- C on sublanes, HW_T on lanes
    x = x_ref[0].astype(jnp.float32)                        # (C, HW_T)
    c_att = c_att_ref[0]                                    # (C, 1)  precomputed cSE scale

    # sSE: 1x1 conv C -> 1 as a lane-dense matmul (1, C) @ (C, HW_T)
    s_logit = jnp.dot(ws_ref[...], x,
                      preferred_element_type=jnp.float32) + bs_ref[0]   # (1, HW_T)
    s_att = jax.nn.sigmoid(s_logit)                          # (1, HW_T)

    # x * cSE + x * sSE  ==  x * (cSE + sSE): one mul per element.
    o_ref[0] = (x * (c_att + s_att)).astype(o_ref.dtype)


def _pick_hw_tile(hw, c, target_bytes=2 * 1024 * 1024):
    """Largest multiple-of-128 divisor of hw with c*tile*4B <= ~target_bytes."""
    if hw % 128 != 0:
        return hw  # full extent (Pallas pads the lane dim internally)
    max_t = max(128, (target_bytes // (4 * c)) // 128 * 128)
    best = 128
    t = 128
    while t <= min(hw, max_t):
        if hw % t == 0:
            best = t
        t += 128
    return best


def scse_attention(x_nchw, w1, b1, w2, b2, ws, bs):
    """x_nchw: (B, C, H, W).  Weights in matmul layout:
       w1: (C, mid), b1: (1, mid), w2: (mid, C), b2: (1, C),
       ws: (C, 1),   bs: (1, 1)."""
    B, C, H, W = x_nchw.shape
    HW = H * W
    x = x_nchw.reshape(B, C, HW)                   # free view, NCHW-native

    # ---- cSE branch in plain JAX: only (B, C)-sized work, fuses in XLA ----
    pooled = jnp.mean(x.astype(jnp.float32), axis=2)            # (B, C)
    h = jnp.maximum(pooled @ w1 + b1, 0.0)                      # (B, mid)
    c_att = jax.nn.sigmoid(h @ w2 + b2)                         # (B, C)
    c_att = c_att[..., None].astype(jnp.float32)                # (B, C, 1)

    ws_t = ws.reshape(1, C).astype(jnp.float32)                 # (1, C)
    bs_s = bs.reshape(1).astype(jnp.float32)                    # (1,) scalar -> SMEM

    hw_t = _pick_hw_tile(HW, C)
    grid = (B, HW // hw_t)

    out = pl.pallas_call(
        scse_kernel,
        out_shape=jax.ShapeDtypeStruct((B, C, HW), x_nchw.dtype),
        grid_spec=pltpu.PrefetchScalarGridSpec(
            num_scalar_prefetch=0,
            grid=grid,
            in_specs=[
                pl.BlockSpec((1, C, hw_t), lambda b, j: (b, 0, j)),   # x tile
                pl.BlockSpec((1, C, 1), lambda b, j: (b, 0, 0)),      # cSE scale (resident per batch)
                pl.BlockSpec((1, C), lambda b, j: (0, 0)),            # ws^T (resident)
                pl.BlockSpec(memory_space=pltpu.MemorySpace.SMEM),    # bs scalar
            ],
            out_specs=pl.BlockSpec((1, C, hw_t), lambda b, j: (b, 0, j)),
        ),
        compiler_params=pltpu.CompilerParams(
            dimension_semantics=("parallel", "parallel"),
            vmem_limit_bytes=32 * 1024 * 1024,
        ),
    )(x, c_att, ws_t, bs_s)

    return out.reshape(B, C, H, W)                # free view back to NCHW


def reference_scse(x, w1, b1, w2, b2, ws, bs):
    """Plain-JAX reference mirroring the PyTorch module (NCHW)."""
    pooled = jnp.mean(x, axis=(2, 3))                     # (B, C)
    h = jnp.maximum(pooled @ w1 + b1, 0.0)                # (B, mid)
    c_att = jax.nn.sigmoid(h @ w2 + b2)                   # (B, C)
    c_att = c_att[:, :, None, None]
    s_logit = jnp.einsum('bchw,c->bhw', x, ws[:, 0]) + bs[0, 0]
    s_att = jax.nn.sigmoid(s_logit)[:, None, :, :]        # (B, 1, H, W)
    return x * c_att + x * s_att


if __name__ == "__main__":
    B, C, H, W = 2, 128, 16, 16
    reduction = 16
    mid = C // reduction

    key = jax.random.PRNGKey(0)
    kx, k1, kb1, k2, kb2, ks, kbs = jax.random.split(key, 7)

    x = jax.random.normal(kx, (B, C, H, W), dtype=jnp.float32)

    # Deterministic synthetic parameters (matmul layout, see scse_attention).
    w1 = jax.random.normal(k1, (C, mid), dtype=jnp.float32) * 0.1
    b1 = jax.random.normal(kb1, (1, mid), dtype=jnp.float32) * 0.1
    w2 = jax.random.normal(k2, (mid, C), dtype=jnp.float32) * 0.1
    b2 = jax.random.normal(kb2, (1, C), dtype=jnp.float32) * 0.1
    ws = jax.random.normal(ks, (C, 1), dtype=jnp.float32) * 0.1
    bs = jax.random.normal(kbs, (1, 1), dtype=jnp.float32) * 0.1

    out = scse_attention(x, w1, b1, w2, b2, ws, bs)
    out = jax.block_until_ready(out)

    ref = reference_scse(x, w1, b1, w2, b2, ws, bs)
    assert out.shape == (B, C, H, W)
    assert jnp.allclose(out, ref, atol=1e-4, rtol=1e-4), "mismatch vs reference"

    print("KERNEL_OK")
</pallas_src>

<mosaic_0001>
module attributes {stable_mosaic.version = 11 : i64} {
  func.func @scse_kernel(%arg0: i32, %arg1: i32, %arg2: memref<1x128x256xf32, #tpu.memory_space<vmem>>, %arg3: memref<1x128x1xf32, #tpu.memory_space<vmem>>, %arg4: memref<1x128xf32, #tpu.memory_space<vmem>>, %arg5: memref<1xf32, #tpu.memory_space<smem>>, %arg6: memref<1x128x256xf32, #tpu.memory_space<vmem>>) attributes {dimension_semantics = [#tpu.dimension_semantics<parallel>, #tpu.dimension_semantics<parallel>], iteration_bounds = array<i64: 2, 1>, scalar_prefetch = 0 : i64, scratch_operands = 0 : i64, tpu.core_type = #tpu.core_type<tc>, window_params = [{transform_indices = @transform_0, window_bounds = array<i64: 1, 128, 256>}, {transform_indices = @transform_1, window_bounds = array<i64: 1, 128, 1>}, {pipeline_mode = #tpu.pipeline_mode<synchronous>, transform_indices = @transform_2, window_bounds = array<i64: 1, 128>}, {transform_indices = @transform_3, window_bounds = array<i64: 1>}, {transform_indices = @transform_4, window_bounds = array<i64: 1, 128, 256>}]} {
    %c0 = arith.constant 0 : index
    %c0_0 = arith.constant 0 : index
    %c0_1 = arith.constant 0 : index
    %0 = vector.load %arg2[%c0, %c0_0, %c0_1] : memref<1x128x256xf32, #tpu.memory_space<vmem>>, vector<1x128x256xf32>
    %1 = vector.shape_cast %0 : vector<1x128x256xf32> to vector<128x256xf32>
    %c0_2 = arith.constant 0 : index
    %c0_3 = arith.constant 0 : index
    %c0_4 = arith.constant 0 : index
    %2 = vector.load %arg3[%c0_2, %c0_3, %c0_4] : memref<1x128x1xf32, #tpu.memory_space<vmem>>, vector<1x128x1xf32>
    %3 = vector.shape_cast %2 : vector<1x128x1xf32> to vector<128x1xf32>
    %c0_5 = arith.constant 0 : index
    %c0_6 = arith.constant 0 : index
    %4 = vector.load %arg4[%c0_5, %c0_6] : memref<1x128xf32, #tpu.memory_space<vmem>>, vector<1x128xf32>
    %cst = arith.constant dense<0.000000e+00> : vector<1x256xf32>
    %5 = tpu.matmul %4, %1, %cst {dimension_numbers = #tpu.dot_dimension_numbers<[1], [0], [0], [1], [0, 0, 1, 1], [], []>} : vector<1x128xf32>, vector<128x256xf32>, vector<1x256xf32> -> vector<1x256xf32>
    %c0_7 = arith.constant 0 : index
    %6 = memref.load %arg5[%c0_7] : memref<1xf32, #tpu.memory_space<smem>>
    %7 = vector.broadcast %6 : f32 to vector<1x256xf32>
    %8 = arith.addf %5, %7 : vector<1x256xf32>
    %9 = arith.negf %8 : vector<1x256xf32>
    %10 = math.exp %9 : vector<1x256xf32>
    %cst_8 = arith.constant 1.000000e+00 : f32
    %11 = vector.broadcast %cst_8 : f32 to vector<1x256xf32>
    %12 = arith.addf %11, %10 : vector<1x256xf32>
    %13 = arith.divf %11, %12 : vector<1x256xf32>
    %14 = vector.broadcast %3 : vector<128x1xf32> to vector<128x256xf32>
    %15 = vector.broadcast %13 : vector<1x256xf32> to vector<128x256xf32>
    %16 = arith.addf %14, %15 : vector<128x256xf32>
    %17 = arith.mulf %1, %16 : vector<128x256xf32>
    %c0_9 = arith.constant 0 : index
    %c0_10 = arith.constant 0 : index
    %c0_11 = arith.constant 0 : index
    %18 = vector.load %arg6[%c0_9, %c0_10, %c0_11] : memref<1x128x256xf32, #tpu.memory_space<vmem>>, vector<1x128x256xf32>
    %19 = vector.shape_cast %18 : vector<1x128x256xf32> to vector<128x256xf32>
    %20 = vector.shape_cast %17 : vector<128x256xf32> to vector<1x128x256xf32>
    tpu.vector_store %arg6[%c0_9, %c0_10, %c0_11], %20 {strides = array<i32>} : memref<1x128x256xf32, #tpu.memory_space<vmem>>, vector<1x128x256xf32>,
    return
  }
  func.func @transform_0(%arg0: i32, %arg1: i32) -> (i32, i32, i32) {
    %c0_i32 = arith.constant 0 : i32
    %c0_i32_0 = arith.constant 0 : i32
    return %arg0, %c0_i32, %arg1 : i32, i32, i32
  }
  func.func @transform_1(%arg0: i32, %arg1: i32) -> (i32, i32, i32) {
    %c0_i32 = arith.constant 0 : i32
    %c0_i32_0 = arith.constant 0 : i32
    %c0_i32_1 = arith.constant 0 : i32
    return %arg0, %c0_i32, %c0_i32_0 : i32, i32, i32
  }
  func.func @transform_2(%arg0: i32, %arg1: i32) -> (i32, i32) {
    %c0_i32 = arith.constant 0 : i32
    %c0_i32_0 = arith.constant 0 : i32
    %c0_i32_1 = arith.constant 0 : i32
    return %c0_i32, %c0_i32_0 : i32, i32
  }
  func.func @transform_3(%arg0: i32, %arg1: i32) -> i32 {
    %c0_i32 = arith.constant 0 : i32
    %c0_i32_0 = arith.constant 0 : i32
    return %c0_i32 : i32
  }
  func.func @transform_4(%arg0: i32, %arg1: i32) -> (i32, i32, i32) {
    %c0_i32 = arith.constant 0 : i32
    %c0_i32_0 = arith.constant 0 : i32
    return %arg0, %c0_i32, %arg1 : i32, i32, i32
  }
}

</mosaic_0001>

<llo_original>
// kernel: tpu_custom_call.1
$region0: #{tpu_custom_call.1}
  #allocation0 [shape = 'u32[]', space=smem, size = 0x4, offset = 0x4, fixed_abs, tag = 'smem constant byte address 0x4 - core index']
  #allocation1 [shape = 'u32[144,128]{1,0:T(1,128)}', space=vmem, size = 0x12000, scoped, tag = 'internal scratch']
  #allocation2 [shape = 'f32[1]{0:T(128)S(6)}', space=smem, size = 0x200, scoped, tag = 'scoped memory for tpu_custom_call.1']
  %s0 = inlined_call_operand.hbm [shape: f32[2,128,256], index: 0, kind: input, shape index: {}]
  %s1 = inlined_call_operand.vmem [shape: f32[2,128,1], index: 1, kind: input, shape index: {}]
  %s2 = inlined_call_operand.vmem [shape: f32[1,128], index: 2, kind: input, shape index: {}]
  %s3 = inlined_call_operand.<no memory space> [shape: f32[1], index: 3, kind: input, shape index: {}]
  %s4 = inlined_call_operand.hbm [shape: f32[2,128,256], index: 4, kind: output, shape index: {}]
  %s5 = sld [smem:[#allocation0]]
  $region53: #{tpu_custom_call.1} parent=0
    _
  %s7 = ssub.s32 1, %s5
  %s8 = scalar_select 0, %s7, %s5
  %9 = sst [smem:[#allocation2]] %s3
  $region1: #{tpu_custom_call.1} parent=0
    #allocation3 [shape = 'u8[262144]{0}', space=vmem, size = 0x40000, scoped, tag = 'input window, operand 0']
    #allocation4 [shape = 's32[2]{0}', space=sflag, size = 0x8, scoped, tag = 'scoped memory for tpu_custom_call.1']
    #allocation5 [shape = 's32[2]{0}', space=sflag, size = 0x8, scoped, tag = 'scoped memory for tpu_custom_call.1']
    #allocation6 [shape = 'u8[262144]{0}', space=vmem, size = 0x40000, scoped, tag = 'output window, operand 0']
    %10 = vsyncpa [#allocation4], 0
    %s11 = scalar_lea.sflag [#allocation4], 1
    %12 = vsyncpa %s11, 0
    %13 = vsyncpa [#allocation5], 0
    %s14 = scalar_lea.sflag [#allocation5], 1
    %15 = vsyncpa %s14, 0
    loop: start=0, step=1, limit=4
    $region2: #{tpu_custom_call.1} parent=1 // loop_pre_header
      _
    $region3: #{tpu_custom_call.1} parent=1 // loop_header
      %s17 = sphi 0, %s21
      %p18 = scmp.ge.s32.totalorder %s17, 4
      %s24 = sphi 0, %s36
      %s25 = sphi 0, %s32
      %s26 = sphi 0, %s24
      %s27 = sphi 0, %s25
      %s28 = sphi 0, %s26
      %s29 = sphi 0, %s27
      %s41 = sphi 0, %s43
      %s44 = sphi 0, %s41
      %s45 = sphi 0, %s44
      %s61 = sphi 0, %s45
      %s67 = sphi 0, %s69
      %s70 = sphi 0, %s67
      %s71 = sphi 0, %s70
      %s87 = sphi 0, %s71
      %s91 = sphi 0, %s91
      %s93 = sphi 0, %s91
      %s94 = sphi 0, %s93
      %s108 = sphi 0, %s94
      %s112 = sphi 0, %s112
      %s114 = sphi 0, %s112
      %s115 = sphi 0, %s114
      %s129 = sphi 0, %s115
      %s137 = sphi 0, %s139
      %s140 = sphi 0, %s137
      %s141 = sphi 0, %s140
      %s157 = sphi 0, %s141
    $region4: #{tpu_custom_call.1} parent=1 // loop_header_branch
      %20 = sbr.rel (%p18) target = $region8
    $region5: #{tpu_custom_call.1} parent=1 // loop_body
      %s22 = ssub.s32 %s17, 1
      %s23 = ssub.s32 %s17, 2
      %s30 = sadd.s32 1, %s25
      %p31 = scmp.ge.s32.totalorder %s30, 1
      %s32 = scalar_select %p31, 0, %s30
      %s33 = sadd.s32 1, %s24
      %s34 = scalar_select %p31, %s33, %s24
      %p35 = scmp.ge.s32.totalorder %s34, 2
      %s36 = scalar_select %p35, 0, %s34
      %s37 = ssub.s32 %s24, %s36
      %s38 = ssub.s32 %s25, %s32
      %s39 = sor.u32 %s37, %s38
      %p40 = scmp.eq.s32.totalorder %s39, 0
      %s42 = sadd.s32 %s41, 1
      %s43 = scalar_select %p40, %s41, %s42
      %p46 = pneg %p40
      %p47 = scmp.eq.s32.totalorder %s17, 1
      %p48 = por %p46, %p47
      %p49 = scmp.ne.s32.totalorder %s41, %s44
      %p50 = scmp.eq.s32.totalorder %s17, 0
      %p51 = por %p49, %p50
      %p52 = scmp.ne.s32.totalorder %s41, %s44
      %p53 = scmp.eq.s32.totalorder %s22, 1
      %p54 = por %p52, %p53
      %p55 = scmp.ne.s32.totalorder %s44, %s45
      %p56 = scmp.eq.s32.totalorder %s22, 0
      %p57 = por %p55, %p56
      %p58 = scmp.ne.s32.totalorder %s44, %s45
      %p59 = scmp.eq.s32.totalorder %s23, 1
      %p60 = por %p58, %p59
      %p62 = scmp.ne.s32.totalorder %s45, %s61
      %p63 = scmp.eq.s32.totalorder %s23, 0
      %p64 = por %p62, %p63
      %s65 = ssub.s32 %s24, %s36
      %p66 = scmp.eq.s32.totalorder %s65, 0
      %s68 = sadd.s32 %s67, 1
      %s69 = scalar_select %p66, %s67, %s68
      %p72 = pneg %p66
      %p73 = scmp.eq.s32.totalorder %s17, 1
      %p74 = por %p72, %p73
      %p75 = scmp.ne.s32.totalorder %s67, %s70
      %p76 = scmp.eq.s32.totalorder %s17, 0
      %p77 = por %p75, %p76
      %p78 = scmp.ne.s32.totalorder %s67, %s70
      %p79 = scmp.eq.s32.totalorder %s22, 1
      %p80 = por %p78, %p79
      %p81 = scmp.ne.s32.totalorder %s70, %s71
      %p82 = scmp.eq.s32.totalorder %s22, 0
      %p83 = por %p81, %p82
      %p84 = scmp.ne.s32.totalorder %s70, %s71
      %p85 = scmp.eq.s32.totalorder %s23, 1
      %p86 = por %p84, %p85
      %p88 = scmp.ne.s32.totalorder %s71, %s87
      %p89 = scmp.eq.s32.totalorder %s23, 0
      %p90 = por %p88, %p89
      %s92 = sadd.s32 %s91, 1
      %p95 = scmp.eq.s32.totalorder %s17, 1
      %p96 = scmp.ne.s32.totalorder %s91, %s93
      %p97 = scmp.eq.s32.totalorder %s17, 0
      %p98 = por %p96, %p97
      %p99 = scmp.ne.s32.totalorder %s91, %s93
      %p100 = scmp.eq.s32.totalorder %s22, 1
      %p101 = por %p99, %p100
      %p102 = scmp.ne.s32.totalorder %s93, %s94
      %p103 = scmp.eq.s32.totalorder %s22, 0
      %p104 = por %p102, %p103
      %p105 = scmp.ne.s32.totalorder %s93, %s94
      %p106 = scmp.eq.s32.totalorder %s23, 1
      %p107 = por %p105, %p106
      %p109 = scmp.ne.s32.totalorder %s94, %s108
      %p110 = scmp.eq.s32.totalorder %s23, 0
      %p111 = por %p109, %p110
      %s113 = sadd.s32 %s112, 1
      %p116 = scmp.eq.s32.totalorder %s17, 1
      %p117 = scmp.ne.s32.totalorder %s112, %s114
      %p118 = scmp.eq.s32.totalorder %s17, 0
      %p119 = por %p117, %p118
      %p120 = scmp.ne.s32.totalorder %s112, %s114
      %p121 = scmp.eq.s32.totalorder %s22, 1
      %p122 = por %p120, %p121
      %p123 = scmp.ne.s32.totalorder %s114, %s115
      %p124 = scmp.eq.s32.totalorder %s22, 0
      %p125 = por %p123, %p124
      %p126 = scmp.ne.s32.totalorder %s114, %s115
      %p127 = scmp.eq.s32.totalorder %s23, 1
      %p128 = por %p126, %p127
      %p130 = scmp.ne.s32.totalorder %s115, %s129
      %p131 = scmp.eq.s32.totalorder %s23, 0
      %p132 = por %p130, %p131
      %s133 = ssub.s32 %s24, %s36
      %s134 = ssub.s32 %s25, %s32
      %s135 = sor.u32 %s133, %s134
      %p136 = scmp.eq.s32.totalorder %s135, 0
      %s138 = sadd.s32 %s137, 1
      %s139 = scalar_select %p136, %s137, %s138
      %p142 = pneg %p136
      %p143 = scmp.eq.s32.totalorder %s17, 1
      %p144 = por %p142, %p143
      %p145 = scmp.ne.s32.totalorder %s137, %s140
      %p146 = scmp.eq.s32.totalorder %s17, 0
      %p147 = por %p145, %p146
      %p148 = scmp.ne.s32.totalorder %s137, %s140
      %p149 = scmp.eq.s32.totalorder %s22, 1
      %p150 = por %p148, %p149
      %p151 = scmp.ne.s32.totalorder %s140, %s141
      %p152 = scmp.eq.s32.totalorder %s22, 0
      %p153 = por %p151, %p152
      %p154 = scmp.ne.s32.totalorder %s140, %s141
      %p155 = scmp.eq.s32.totalorder %s23, 1
      %p156 = por %p154, %p155
      %p158 = scmp.ne.s32.totalorder %s141, %s157
      %p159 = scmp.eq.s32.totalorder %s23, 0
      %p160 = por %p158, %p159
      %p161 = scmp.le.s32.totalorder 1, %s17
      %p162 = scmp.lt.s32.totalorder %s17, 3
      %p163 = pnand %p161, %p162
      %p164 = pneg %p163
      // Predicated region
      $region9: #{tpu_custom_call.1} parent=5 // pred_check
        _
      $region10: #{tpu_custom_call.1} parent=5 // pred_check_branch
        %166 = sbr.rel (%p163) target = $region12
      $region11: #{tpu_custom_call.1} parent=5 // pred_region
        %s167 = ssub.s32 %s17, 1
        // Predicated region
        $region13: #{tpu_custom_call.1} parent=11 // pred_check
          %p168 = pneg %p104
        $region14: #{tpu_custom_call.1} parent=11 // pred_check_branch
          %170 = sbr.rel (%p168) target = $region16
        $region15: #{tpu_custom_call.1} parent=11 // pred_region
          _
        $region16: #{tpu_custom_call.1} parent=11 // pred_fallthru
          _
        // Predicated region
        $region17: #{tpu_custom_call.1} parent=11 // pred_check
          %p171 = pneg %p125
        $region18: #{tpu_custom_call.1} parent=11 // pred_check_branch
          %173 = sbr.rel (%p171) target = $region20
        $region19: #{tpu_custom_call.1} parent=11 // pred_region
          _
        $region20: #{tpu_custom_call.1} parent=11 // pred_fallthru
          _
      $region12: #{tpu_custom_call.1} parent=5 // pred_fallthru
        _
      %p174 = scmp.lt.s32.totalorder %s17, 2
      // Predicated region
      $region21: #{tpu_custom_call.1} parent=5 // pred_check
        %p175 = pneg %p174
      $region22: #{tpu_custom_call.1} parent=5 // pred_check_branch
        %177 = sbr.rel (%p175) target = $region24
      $region23: #{tpu_custom_call.1} parent=5 // pred_region
        // Predicated region
        $region25: #{tpu_custom_call.1} parent=23 // pred_check
          %p178 = pneg %p51
        $region26: #{tpu_custom_call.1} parent=23 // pred_check_branch
          %180 = sbr.rel (%p178) target = $region28
        $region27: #{tpu_custom_call.1} parent=23 // pred_region
          %s181 = sand.u32 %s41, 1
          %s182 = scalar_lea.sflag [#allocation4], %s181
          %s183 = sand.u32 %s41, 1
          %s184 = smul.addr %s183, 256
          %s185 = scalar_lea.vmem [#allocation3], %s184
          %s186 = smul.u32 2, %s25
          %s188 = ssub.s32 4096, 4096
          %189 = vsyncadd %s182, %s188
          %s190 = smul.addr %s24, 32
          %s191 = sadd.s32 %s186, %s190
          %s192 = smul.addr %s191, 128
          %s193 = scalar_lea.hbm %s0, %s192
          %s194 = sshll.u32 %s185, 4
          %s195 = int_to_ptr.vmem [resolvable:$true] %s194
          %200 = dma.hbm_to_vmem [thread:$0]  %s193, 4096, %s195, %s182, 256, 256, 16
        $region28: #{tpu_custom_call.1} parent=23 // pred_fallthru
          _
        // Predicated region
        $region29: #{tpu_custom_call.1} parent=23 // pred_check
          %p201 = pneg %p77
        $region30: #{tpu_custom_call.1} parent=23 // pred_check_branch
          %203 = sbr.rel (%p201) target = $region32
        $region31: #{tpu_custom_call.1} parent=23 // pred_region
          %p204 = scmp.lt.s32.totalorder %s24, 1
          %s205 = scalar_select %p204, %s24, 1
          %s206 = smul.addr %s205, 16
          %s207 = smul.addr %s206, 8
          %s208 = scalar_lea.vmem %s1, %s207
        $region32: #{tpu_custom_call.1} parent=23 // pred_fallthru
          _
      $region24: #{tpu_custom_call.1} parent=5 // pred_fallthru
        _
      %p209 = scmp.le.s32.totalorder 1, %s17
      %p210 = scmp.lt.s32.totalorder %s17, 3
      %p211 = pnand %p209, %p210
      %p212 = pneg %p211
      // Predicated region
      $region33: #{tpu_custom_call.1} parent=5 // pred_check
        _
      $region34: #{tpu_custom_call.1} parent=5 // pred_check_branch
        %214 = sbr.rel (%p211) target = $region36
      $region35: #{tpu_custom_call.1} parent=5 // pred_region
        %s215 = ssub.s32 %s17, 1
        %s216 = sand.u32 %s44, 1
        %s217 = scalar_lea.sflag [#allocation4], %s216
        %s218 = sand.u32 %s44, 1
        %s219 = smul.addr %s218, 256
        %s220 = scalar_lea.vmem [#allocation3], %s219
        // Predicated region
        $region37: #{tpu_custom_call.1} parent=35 // pred_check
          %p221 = pneg %p57
        $region38: #{tpu_custom_call.1} parent=35 // pred_check_branch
          %223 = sbr.rel (%p221) target = $region40
        $region39: #{tpu_custom_call.1} parent=35 // pred_region
          %224 = dma.done %s217, 4096
        $region40: #{tpu_custom_call.1} parent=35 // pred_fallthru
          _
        %s225 = sand.u32 %s44, 1
        %s226 = scalar_lea.sflag [#allocation4], %s225
        %s227 = sand.u32 %s44, 1
        %s228 = smul.addr %s227, 256
        %s229 = scalar_lea.vmem [#allocation3], %s228
        %p230 = pneg %p57
        %p231 = pneg %p54
        %p232 = scmp.lt.s32.totalorder %s26, 1
        %s233 = scalar_select %p232, %s26, 1
        %s234 = smul.addr %s233, 16
        %s235 = smul.addr %s234, 8
        %s236 = scalar_lea.vmem %s1, %s235
        %p237 = pneg %p83
        %p238 = pneg %p80
        %p239 = pneg %p104
        %p240 = pneg %p101
        %p241 = pneg %p125
        %p242 = pneg %p122
        %p243 = pneg %p153
        %p244 = pneg %p150
        %s245 = sand.u32 %s140, 1
        %s246 = scalar_lea.sflag [#allocation5], %s245
        %s247 = sand.u32 %s140, 1
        %s248 = smul.addr %s247, 256
        %s249 = scalar_lea.vmem [#allocation6], %s248
        %s250 = smul.u32 2, %s27
        %p251 = scmp.lt.s32.totalorder %s26, 1
        %s252 = scalar_select %p251, %s26, 1
        %s253 = smul.addr %s252, 16
        %s254 = smul.addr %s253, 8
        %s255 = scalar_lea.vmem %s1, %s254
        %s256 = smul.u32 2, %s27
        %v257 = vld [vmem:[%s220] sm:$0xff]
        %v258 = vld [vmem:[%s220 + $0x8] sm:$0xff]
        %v259 = vld [vmem:[%s220 + $0x10] sm:$0xff]
        %v260 = vld [vmem:[%s220 + $0x18] sm:$0xff]
        %v261 = vld [vmem:[%s220 + $0x20] sm:$0xff]
        %v262 = vld [vmem:[%s220 + $0x28] sm:$0xff]
        %v263 = vld [vmem:[%s220 + $0x30] sm:$0xff]
        %v264 = vld [vmem:[%s220 + $0x38] sm:$0xff]
        %v265 = vld [vmem:[%s220 + $0x40] sm:$0xff]
        %v266 = vld [vmem:[%s220 + $0x48] sm:$0xff]
        %v267 = vld [vmem:[%s220 + $0x50] sm:$0xff]
        %v268 = vld [vmem:[%s220 + $0x58] sm:$0xff]
        %v269 = vld [vmem:[%s220 + $0x60] sm:$0xff]
        %v270 = vld [vmem:[%s220 + $0x68] sm:$0xff]
        %v271 = vld [vmem:[%s220 + $0x70] sm:$0xff]
        %v272 = vld [vmem:[%s220 + $0x78] sm:$0xff]
        %v273 = vld [vmem:[%s220 + $0x80] sm:$0xff]
        %v274 = vld [vmem:[%s220 + $0x88] sm:$0xff]
        %v275 = vld [vmem:[%s220 + $0x90] sm:$0xff]
        %v276 = vld [vmem:[%s220 + $0x98] sm:$0xff]
        %v277 = vld [vmem:[%s220 + $0xa0] sm:$0xff]
        %v278 = vld [vmem:[%s220 + $0xa8] sm:$0xff]
        %v279 = vld [vmem:[%s220 + $0xb0] sm:$0xff]
        %v280 = vld [vmem:[%s220 + $0xb8] sm:$0xff]
        %v281 = vld [vmem:[%s220 + $0xc0] sm:$0xff]
        %v282 = vld [vmem:[%s220 + $0xc8] sm:$0xff]
        %v283 = vld [vmem:[%s220 + $0xd0] sm:$0xff]
        %v284 = vld [vmem:[%s220 + $0xd8] sm:$0xff]
        %v285 = vld [vmem:[%s220 + $0xe0] sm:$0xff]
        %v286 = vld [vmem:[%s220 + $0xe8] sm:$0xff]
        %v287 = vld [vmem:[%s220 + $0xf0] sm:$0xff]
        %v288 = vld [vmem:[%s220 + $0xf8] sm:$0xff]
        %v289 = vld [vmem:[%s255] sm:$0xff]
        %v290 = vld [vmem:[%s255 + $0x8] sm:$0xff]
        %v291 = vld [vmem:[%s255 + $0x10] sm:$0xff]
        %v292 = vld [vmem:[%s255 + $0x18] sm:$0xff]
        %v293 = vld [vmem:[%s255 + $0x20] sm:$0xff]
        %v294 = vld [vmem:[%s255 + $0x28] sm:$0xff]
        %v295 = vld [vmem:[%s255 + $0x30] sm:$0xff]
        %v296 = vld [vmem:[%s255 + $0x38] sm:$0xff]
        %v297 = vld [vmem:[%s255 + $0x40] sm:$0xff]
        %v298 = vld [vmem:[%s255 + $0x48] sm:$0xff]
        %v299 = vld [vmem:[%s255 + $0x50] sm:$0xff]
        %v300 = vld [vmem:[%s255 + $0x58] sm:$0xff]
        %v301 = vld [vmem:[%s255 + $0x60] sm:$0xff]
        %v302 = vld [vmem:[%s255 + $0x68] sm:$0xff]
        %v303 = vld [vmem:[%s255 + $0x70] sm:$0xff]
        %v304 = vld [vmem:[%s255 + $0x78] sm:$0xff]
        %v305 = vld [vmem:[%s2] sm:$0x1]
        %s306 = sld [smem:[#allocation2]]
        %v307 = vstv %s306
        %308 = vmatprep.subr.mxu0 %v288
        %309 = vmatpush1.msra.mxu0 %v287
        %310 = vmatprep.subr.mxu0 %v286
        %311 = vmatpush1.msra.mxu0 %v285
        %312 = vmatprep.subr.mxu0 %v284
        %313 = vmatpush1.msra.mxu0 %v283
        %314 = vmatprep.subr.mxu0 %v282
        %315 = vmatpush1.msra.mxu0 %v281
        %316 = vmatprep.subr.mxu0 %v280
        %317 = vmatpush1.msra.mxu0 %v279
        %318 = vmatprep.subr.mxu0 %v278
        %319 = vmatpush1.msra.mxu0 %v277
        %320 = vmatprep.subr.mxu0 %v276
        %321 = vmatpush1.msra.mxu0 %v275
        %322 = vmatprep.subr.mxu0 %v274
        %323 = vmatpush1.msra.mxu0 %v273
        %324 = vmatprep.subr.mxu0 %v272
        %325 = vmatpush1.msra.mxu0 %v271
        %326 = vmatprep.subr.mxu0 %v270
        %327 = vmatpush1.msra.mxu0 %v269
        %328 = vmatprep.subr.mxu0 %v268
        %329 = vmatpush1.msra.mxu0 %v267
        %330 = vmatprep.subr.mxu0 %v266
        %331 = vmatpush1.msra.mxu0 %v265
        %332 = vmatprep.subr.mxu0 %v264
        %333 = vmatpush1.msra.mxu0 %v263
        %334 = vmatprep.subr.mxu0 %v262
        %335 = vmatpush1.msra.mxu0 %v261
        %336 = vmatprep.subr.mxu0 %v260
        %337 = vmatpush1.msra.mxu0 %v259
        %338 = vmatprep.subr.mxu0 %v258
        %339 = vmatpush1.msra.mxu0 %v257
        %340 = vmatprep.subr.mxu0 0.0
        %341 = vmatpush2.msra.mxu0 0.0
        %342 = vmatprep.subr.mxu0 0.0
        %343 = vmatpush2.msra.mxu0 0.0
        %344 = vmatprep.subr.mxu0 0.0
        %345 = vmatpush2.msra.mxu0 0.0
        %346 = vmatprep.subr.mxu0 0.0
        %347 = vmatpush2.msra.mxu0 0.0
        %348 = vmatprep.subr.mxu0 0.0
        %349 = vmatpush2.msra.mxu0 0.0
        %350 = vmatprep.subr.mxu0 0.0
        %351 = vmatpush2.msra.mxu0 0.0
        %352 = vmatprep.subr.mxu0 0.0
        %353 = vmatpush2.msra.mxu0 0.0
        %354 = vmatprep.subr.mxu0 0.0
        %355 = vmatpush2.msra.mxu0 0.0
        %356 = vmatprep.subr.mxu0 0.0
        %357 = vmatpush2.msra.mxu0 0.0
        %358 = vmatprep.subr.mxu0 0.0
        %359 = vmatpush2.msra.mxu0 0.0
        %360 = vmatprep.subr.mxu0 0.0
        %361 = vmatpush2.msra.mxu0 0.0
        %362 = vmatprep.subr.mxu0 0.0
        %363 = vmatpush2.msra.mxu0 0.0
        %364 = vmatprep.subr.mxu0 0.0
        %365 = vmatpush2.msra.mxu0 0.0
        %366 = vmatprep.subr.mxu0 0.0
        %367 = vmatpush2.msra.mxu0 0.0
        %368 = vmatprep.subr.mxu0 0.0
        %369 = vmatpush2.msra.mxu0 0.0
        %370 = vmatprep.subr.mxu0 0.0
        %371 = vmatpush2.msra.mxu0 0.0
        %372 = vmatprep.mubr.f32.mxu0 0.0
        %373 = vmatmul.mubr.f32.gmra.mxu0 %v305
        %v374 = vpop.f32.mrf.mxu0
        %v375 = vadd.f32 %v307, %v374
        %v376 = vpop.f32.mrf.mxu0
        %v377 = vadd.f32 %v307, %v376
        %378 = vdwg.mxu0
        %v379 = vxor.u32 %v375, 2147483648
        %v380 = vxor.u32 %v377, 2147483648
        %v381 = vmul.f32 %v379, 1.442695
        %v382 = vpow.pop %v381
        %v383 = vmul.f32 %v380, 1.442695
        %v384 = vpow.pop %v383
        %v385 = vadd.f32 %v382, 1.0
        %v386 = vadd.f32 %v384, 1.0
        %v387 = vrcp.pop %v385
        %v388 = vmul.f32 1.0, %v387
        %v389 = vrcp.pop %v386
        %v390 = vmul.f32 1.0, %v389
        %392 = vset.pattern.permute.xlu0 0
        %393 = vperm.xlu0 %392, %v289
        %v394 = vpop.permute.xlu0 %393
        %397 = vset.pattern.permute.xlu0 0
        %398 = vperm.xlu0 %397, %v290
        %v399 = vpop.permute.xlu0 %398
        %402 = vset.pattern.permute.xlu0 0
        %403 = vperm.xlu0 %402, %v291
        %v404 = vpop.permute.xlu0 %403
        %407 = vset.pattern.permute.xlu0 0
        %408 = vperm.xlu0 %407, %v292
        %v409 = vpop.permute.xlu0 %408
        %412 = vset.pattern.permute.xlu0 0
        %413 = vperm.xlu0 %412, %v293
        %v414 = vpop.permute.xlu0 %413
        %417 = vset.pattern.permute.xlu0 0
        %418 = vperm.xlu0 %417, %v294
        %v419 = vpop.permute.xlu0 %418
        %422 = vset.pattern.permute.xlu0 0
        %423 = vperm.xlu0 %422, %v295
        %v424 = vpop.permute.xlu0 %423
        %427 = vset.pattern.permute.xlu0 0
        %428 = vperm.xlu0 %427, %v296
        %v429 = vpop.permute.xlu0 %428
        %432 = vset.pattern.permute.xlu0 0
        %433 = vperm.xlu0 %432, %v297
        %v434 = vpop.permute.xlu0 %433
        %437 = vset.pattern.permute.xlu0 0
        %438 = vperm.xlu0 %437, %v298
        %v439 = vpop.permute.xlu0 %438
        %442 = vset.pattern.permute.xlu0 0
        %443 = vperm.xlu0 %442, %v299
        %v444 = vpop.permute.xlu0 %443
        %447 = vset.pattern.permute.xlu0 0
        %448 = vperm.xlu0 %447, %v300
        %v449 = vpop.permute.xlu0 %448
        %452 = vset.pattern.permute.xlu0 0
        %453 = vperm.xlu0 %452, %v301
        %v454 = vpop.permute.xlu0 %453
        %457 = vset.pattern.permute.xlu0 0
        %458 = vperm.xlu0 %457, %v302
        %v459 = vpop.permute.xlu0 %458
        %462 = vset.pattern.permute.xlu0 0
        %463 = vperm.xlu0 %462, %v303
        %v464 = vpop.permute.xlu0 %463
        %467 = vset.pattern.permute.xlu0 0
        %468 = vperm.xlu0 %467, %v304
        %v469 = vpop.permute.xlu0 %468
        %v471 = vlaneseq
        %v472 = vshrl.u32 %v471, 7
        %v473 = vsub.s32 0, %v472
        %v474 = vrot.slane %v388, %v473
        %v475 = vlaneseq
        %v476 = vshrl.u32 %v475, 7
        %v477 = vsub.s32 0, %v476
        %v478 = vrot.slane %v390, %v477
        %v479 = vadd.f32 %v394, %v474
        %v480 = vadd.f32 %v394, %v478
        %v481 = vadd.f32 %v399, %v474
        %v482 = vadd.f32 %v399, %v478
        %v483 = vadd.f32 %v404, %v474
        %v484 = vadd.f32 %v404, %v478
        %v485 = vadd.f32 %v409, %v474
        %v486 = vadd.f32 %v409, %v478
        %v487 = vadd.f32 %v414, %v474
        %v488 = vadd.f32 %v414, %v478
        %v489 = vadd.f32 %v419, %v474
        %v490 = vadd.f32 %v419, %v478
        %v491 = vadd.f32 %v424, %v474
        %v492 = vadd.f32 %v424, %v478
        %v493 = vadd.f32 %v429, %v474
        %v494 = vadd.f32 %v429, %v478
        %v495 = vadd.f32 %v434, %v474
        %v496 = vadd.f32 %v434, %v478
        %v497 = vadd.f32 %v439, %v474
        %v498 = vadd.f32 %v439, %v478
        %v499 = vadd.f32 %v444, %v474
        %v500 = vadd.f32 %v444, %v478
        %v501 = vadd.f32 %v449, %v474
        %v502 = vadd.f32 %v449, %v478
        %v503 = vadd.f32 %v454, %v474
        %v504 = vadd.f32 %v454, %v478
        %v505 = vadd.f32 %v459, %v474
        %v506 = vadd.f32 %v459, %v478
        %v507 = vadd.f32 %v464, %v474
        %v508 = vadd.f32 %v464, %v478
        %v509 = vadd.f32 %v469, %v474
        %v510 = vadd.f32 %v469, %v478
        %v511 = vmul.f32 %v257, %v479
        %v512 = vmul.f32 %v258, %v480
        %v513 = vmul.f32 %v259, %v481
        %v514 = vmul.f32 %v260, %v482
        %v515 = vmul.f32 %v261, %v483
        %v516 = vmul.f32 %v262, %v484
        %v517 = vmul.f32 %v263, %v485
        %v518 = vmul.f32 %v264, %v486
        %v519 = vmul.f32 %v265, %v487
        %v520 = vmul.f32 %v266, %v488
        %v521 = vmul.f32 %v267, %v489
        %v522 = vmul.f32 %v268, %v490
        %v523 = vmul.f32 %v269, %v491
        %v524 = vmul.f32 %v270, %v492
        %v525 = vmul.f32 %v271, %v493
        %v526 = vmul.f32 %v272, %v494
        %v527 = vmul.f32 %v273, %v495
        %v528 = vmul.f32 %v274, %v496
        %v529 = vmul.f32 %v275, %v497
        %v530 = vmul.f32 %v276, %v498
        %v531 = vmul.f32 %v277, %v499
        %v532 = vmul.f32 %v278, %v500
        %v533 = vmul.f32 %v279, %v501
        %v534 = vmul.f32 %v280, %v502
        %v535 = vmul.f32 %v281, %v503
        %v536 = vmul.f32 %v282, %v504
        %v537 = vmul.f32 %v283, %v505
        %v538 = vmul.f32 %v284, %v506
        %v539 = vmul.f32 %v285, %v507
        %v540 = vmul.f32 %v286, %v508
        %v541 = vmul.f32 %v287, %v509
        %v542 = vmul.f32 %v288, %v510
        %543 = vst [vmem:[%s249] sm:$0xff] %v511
        %544 = vst [vmem:[%s249 + $0x8] sm:$0xff] %v512
        %545 = vst [vmem:[%s249 + $0x10] sm:$0xff] %v513
        %546 = vst [vmem:[%s249 + $0x18] sm:$0xff] %v514
        %547 = vst [vmem:[%s249 + $0x20] sm:$0xff] %v515
        %548 = vst [vmem:[%s249 + $0x28] sm:$0xff] %v516
        %549 = vst [vmem:[%s249 + $0x30] sm:$0xff] %v517
        %550 = vst [vmem:[%s249 + $0x38] sm:$0xff] %v518
        %551 = vst [vmem:[%s249 + $0x40] sm:$0xff] %v519
        %552 = vst [vmem:[%s249 + $0x48] sm:$0xff] %v520
        %553 = vst [vmem:[%s249 + $0x50] sm:$0xff] %v521
        %554 = vst [vmem:[%s249 + $0x58] sm:$0xff] %v522
        %555 = vst [vmem:[%s249 + $0x60] sm:$0xff] %v523
        %556 = vst [vmem:[%s249 + $0x68] sm:$0xff] %v524
        %557 = vst [vmem:[%s249 + $0x70] sm:$0xff] %v525
        %558 = vst [vmem:[%s249 + $0x78] sm:$0xff] %v526
        %559 = vst [vmem:[%s249 + $0x80] sm:$0xff] %v527
        %560 = vst [vmem:[%s249 + $0x88] sm:$0xff] %v528
        %561 = vst [vmem:[%s249 + $0x90] sm:$0xff] %v529
        %562 = vst [vmem:[%s249 + $0x98] sm:$0xff] %v530
        %563 = vst [vmem:[%s249 + $0xa0] sm:$0xff] %v531
        %564 = vst [vmem:[%s249 + $0xa8] sm:$0xff] %v532
        %565 = vst [vmem:[%s249 + $0xb0] sm:$0xff] %v533
        %566 = vst [vmem:[%s249 + $0xb8] sm:$0xff] %v534
        %567 = vst [vmem:[%s249 + $0xc0] sm:$0xff] %v535
        %568 = vst [vmem:[%s249 + $0xc8] sm:$0xff] %v536
        %569 = vst [vmem:[%s249 + $0xd0] sm:$0xff] %v537
        %570 = vst [vmem:[%s249 + $0xd8] sm:$0xff] %v538
        %571 = vst [vmem:[%s249 + $0xe0] sm:$0xff] %v539
        %572 = vst [vmem:[%s249 + $0xe8] sm:$0xff] %v540
        %573 = vst [vmem:[%s249 + $0xf0] sm:$0xff] %v541
        %574 = vst [vmem:[%s249 + $0xf8] sm:$0xff] %v542
        %s575 = sand.u32 %s140, 1
        %s576 = scalar_lea.sflag [#allocation5], %s575
        %s577 = sand.u32 %s140, 1
        %s578 = smul.addr %s577, 256
        %s579 = scalar_lea.vmem [#allocation6], %s578
        // Predicated region
        $region41: #{tpu_custom_call.1} parent=35 // pred_check
          %p580 = pneg %p150
        $region42: #{tpu_custom_call.1} parent=35 // pred_check_branch
          %582 = sbr.rel (%p580) target = $region44
        $region43: #{tpu_custom_call.1} parent=35 // pred_region
          %s583 = smul.u32 2, %s27
          %s585 = ssub.s32 4096, 4096
          %586 = vsyncadd %s576, %s585
          %s587 = smul.addr %s26, 32
          %s588 = sadd.s32 %s583, %s587
          %s589 = smul.addr %s588, 128
          %s590 = scalar_lea.hbm %s4, %s589
          %s591 = sshll.u32 %s579, 4
          %s592 = int_to_ptr.vmem [resolvable:$true] %s591
          %597 = dma.vmem_to_hbm [thread:$0]  %s592, 4096, %s590, %s576, 256, 256, 16
        $region44: #{tpu_custom_call.1} parent=35 // pred_fallthru
          _
      $region36: #{tpu_custom_call.1} parent=5 // pred_fallthru
        _
      %p598 = scmp.le.s32.totalorder 2, %s17
      // Predicated region
      $region45: #{tpu_custom_call.1} parent=5 // pred_check
        %p599 = pneg %p598
      $region46: #{tpu_custom_call.1} parent=5 // pred_check_branch
        %601 = sbr.rel (%p599) target = $region48
      $region47: #{tpu_custom_call.1} parent=5 // pred_region
        %s602 = ssub.s32 %s17, 2
        // Predicated region
        $region49: #{tpu_custom_call.1} parent=47 // pred_check
          %p603 = pneg %p156
        $region50: #{tpu_custom_call.1} parent=47 // pred_check_branch
          %605 = sbr.rel (%p603) target = $region52
        $region51: #{tpu_custom_call.1} parent=47 // pred_region
          %s606 = sand.u32 %s141, 1
          %s607 = scalar_lea.sflag [#allocation5], %s606
          %s608 = sand.u32 %s141, 1
          %s609 = smul.addr %s608, 256
          %s610 = scalar_lea.vmem [#allocation6], %s609
          %611 = dma.done %s607, 4096
        $region52: #{tpu_custom_call.1} parent=47 // pred_fallthru
          _
      $region48: #{tpu_custom_call.1} parent=5 // pred_fallthru
        _
    $region6: #{tpu_custom_call.1} parent=1 // loop_footer
      %s21 = sadd.s32 1, %s17
    $region7: #{tpu_custom_call.1} parent=1 // loop_footer_branch
      %16 = sbr.rel target = $region3
    $region8: #{tpu_custom_call.1} parent=1 // loop_exit
      _
    %612 = vsyncpa [#allocation4], 1
    %s613 = scalar_lea.sflag [#allocation4], 1
    %614 = vsyncpa %s613, 1
    %615 = vsyncpa [#allocation5], 1
    %s616 = scalar_lea.sflag [#allocation5], 1
    %617 = vsyncpa %s616, 1

</llo_original>
